<compile_context>
chip_gen: v7x
topology: tpu7x:2x2x1
jax: 0.10.0
libtpu: 0.0.40
codegen_flags: <defaults>
</compile_context>

<pallas_src>
import math
import functools

import jax
import jax.numpy as jnp
from jax import lax
from jax.experimental import pallas as pl
from jax.experimental.pallas import tpu as pltpu


def _ln_vmp_kernel(mu_ref, sigma_ref, w_ref, b_ref, sp_rho_ref, sp_brho_ref,
                   out_mu_ref, out_sigma_ref, *, tol):
    mu = mu_ref[...].astype(jnp.float32)          # (TM, H)
    sigma = sigma_ref[...].astype(jnp.float32)    # (TM, H)

    h = mu.shape[-1]
    mean = jnp.mean(mu, axis=-1, keepdims=True)
    centered = mu - mean
    # torch.var is unbiased by default -> divide by (H - 1); two-pass form
    # kept for numerical safety with low-precision inputs.
    var = jnp.sum(centered * centered, axis=-1, keepdims=True) * (1.0 / (h - 1)) + tol
    inv_std = lax.rsqrt(var)
    inv_var = inv_std * inv_std                   # 1/var without a divide

    # Params arrive pre-cast to f32 and softplus'ed from the wrapper: (1, H),
    # broadcast over the row tile.
    w = w_ref[...]
    b = b_ref[...]
    sp_rho = sp_rho_ref[...]
    sp_brho = sp_brho_ref[...]

    out_mu_ref[...] = (centered * inv_std * w + b).astype(out_mu_ref.dtype)
    out_sigma_ref[...] = (sigma * inv_var * sp_rho + sp_brho).astype(out_sigma_ref.dtype)


def layer_norm_vmp(mu, sigma, weight, rho, bias, b_rho, *, tol=1e-9,
                   tile_rows=None, vmem_limit_bytes=48 * 1024 * 1024):
    """mu, sigma: (..., H); params: (H,). Returns (out_mu, out_sigma), same shapes."""
    orig_shape = mu.shape
    H = orig_shape[-1]
    mu2 = mu.reshape(-1, H)
    sigma2 = sigma.reshape(-1, H)
    R = mu2.shape[0]

    # Hoist per-feature work out of the kernel body: done once here instead of
    # once per grid step inside the kernel.
    w2 = weight.astype(jnp.float32).reshape(1, H)
    b2 = bias.astype(jnp.float32).reshape(1, H)
    sp_rho2 = jax.nn.softplus(rho.astype(jnp.float32)).reshape(1, H)
    sp_brho2 = jax.nn.softplus(b_rho.astype(jnp.float32)).reshape(1, H)

    # --- Auto-size the row tile against a conservative VMEM budget. ---------
    # Per grid step: 4 row-tiled streams (2 in + 2 out) x double buffering,
    # f32 working set.  32 MiB of tile data + params stays well under v7x's
    # 64 MiB physical VMEM per TensorCore; v5e/v6e have more headroom.
    if tile_rows is None:
        data_budget = 32 * 1024 * 1024
        bytes_per_row = 4 * 2 * H * 4            # 4 streams x 2 buffers x f32
        tile_rows = max(8, min(1024, data_budget // bytes_per_row))
        tile_rows = (tile_rows // 8) * 8
    # Never tile bigger than the (8-rounded) problem itself.
    tile_rows = min(tile_rows, max(8, ((R + 7) // 8) * 8))

    # --- Pad rows so the grid covers R with the chosen tile size. -----------
    num_tiles = pl.cdiv(R, tile_rows)
    R_pad = num_tiles * tile_rows
    if R_pad != R:
        pad = R_pad - R
        mu2 = jnp.pad(mu2, ((0, pad), (0, 0)))      # zero rows -> finite results
        sigma2 = jnp.pad(sigma2, ((0, pad), (0, 0)))

    row_spec = pl.BlockSpec((tile_rows, H), lambda i: (i, 0))
    par_spec = pl.BlockSpec((1, H), lambda i: (0, 0))

    out_mu, out_sigma = pl.pallas_call(
        functools.partial(_ln_vmp_kernel, tol=tol),
        out_shape=(
            jax.ShapeDtypeStruct((R_pad, H), mu.dtype),
            jax.ShapeDtypeStruct((R_pad, H), sigma.dtype),
        ),
        grid_spec=pltpu.PrefetchScalarGridSpec(
            num_scalar_prefetch=0,
            grid=(num_tiles,),
            in_specs=[row_spec, row_spec, par_spec, par_spec, par_spec, par_spec],
            out_specs=[row_spec, row_spec],
        ),
        compiler_params=pltpu.CompilerParams(
            dimension_semantics=("parallel",),
            vmem_limit_bytes=vmem_limit_bytes),
    )(mu2, sigma2, w2, b2, sp_rho2, sp_brho2)

    out_mu = out_mu[:R].reshape(orig_shape)
    out_sigma = out_sigma[:R].reshape(orig_shape)
    return out_mu, out_sigma


def _reference(mu, sigma, weight, rho, bias, b_rho, tol=1e-9):
    mean = jnp.mean(mu, axis=-1, keepdims=True)
    H = mu.shape[-1]
    var = jnp.sum((mu - mean) ** 2, axis=-1, keepdims=True) / (H - 1) + tol
    out_mu = (mu - mean) / jnp.sqrt(var) * weight + bias
    out_sigma = sigma / var * jax.nn.softplus(rho) + jax.nn.softplus(b_rho)
    return out_mu, out_sigma


if __name__ == "__main__":
    key = jax.random.PRNGKey(0)
    B, S, H = 2, 8, 32           # normalized_shape = (H,) = (32,)
    tol = 1e-9
    var_init = (0.001, 0.01)

    k_mu, k_sigma, k_rho, k_brho = jax.random.split(key, 4)
    mu = jax.random.normal(k_mu, (B, S, H), dtype=jnp.float32)
    sigma = jax.nn.softplus(jax.random.normal(k_sigma, (B, S, H), dtype=jnp.float32))

    # Deterministic parameter init matching the module's __init__
    rho1 = math.log(math.exp(var_init[0]) - 1.0)
    rho2 = math.log(math.exp(var_init[1]) - 1.0)
    weight = jnp.ones((H,), jnp.float32)
    bias = jnp.zeros((H,), jnp.float32)
    rho = jax.random.uniform(k_rho, (H,), jnp.float32, minval=rho1, maxval=rho2)
    b_rho = jax.random.uniform(k_brho, (H,), jnp.float32, minval=rho1, maxval=rho2)

    out_mu, out_sigma = layer_norm_vmp(mu, sigma, weight, rho, bias, b_rho, tol=tol)
    jax.block_until_ready((out_mu, out_sigma))

    ref_mu, ref_sigma = _reference(mu, sigma, weight, rho, bias, b_rho, tol=tol)
    assert jnp.allclose(out_mu, ref_mu, atol=1e-5, rtol=1e-5)
    assert jnp.allclose(out_sigma, ref_sigma, atol=1e-5, rtol=1e-5)

    # Also exercise a larger, non-divisible row count to cover padding + the
    # auto-sized (large) tiles.
    B2, S2 = 3, 37
    mu_l = jax.random.normal(k_mu, (B2, S2, H), dtype=jnp.float32)
    sigma_l = jax.nn.softplus(jax.random.normal(k_sigma, (B2, S2, H), dtype=jnp.float32))
    out_mu_l, out_sigma_l = layer_norm_vmp(mu_l, sigma_l, weight, rho, bias, b_rho, tol=tol)
    jax.block_until_ready((out_mu_l, out_sigma_l))
    ref_mu_l, ref_sigma_l = _reference(mu_l, sigma_l, weight, rho, bias, b_rho, tol=tol)
    assert jnp.allclose(out_mu_l, ref_mu_l, atol=1e-5, rtol=1e-5)
    assert jnp.allclose(out_sigma_l, ref_sigma_l, atol=1e-5, rtol=1e-5)

    print("KERNEL_OK")
</pallas_src>

<mosaic_0001>
module attributes {stable_mosaic.version = 11 : i64} {
  func.func @_ln_vmp_kernel(%arg0: i32, %arg1: memref<16x32xf32, #tpu.memory_space<vmem>>, %arg2: memref<16x32xf32, #tpu.memory_space<vmem>>, %arg3: memref<1x32xf32, #tpu.memory_space<vmem>>, %arg4: memref<1x32xf32, #tpu.memory_space<vmem>>, %arg5: memref<1x32xf32, #tpu.memory_space<vmem>>, %arg6: memref<1x32xf32, #tpu.memory_space<vmem>>, %arg7: memref<16x32xf32, #tpu.memory_space<vmem>>, %arg8: memref<16x32xf32, #tpu.memory_space<vmem>>) attributes {dimension_semantics = [#tpu.dimension_semantics<parallel>], iteration_bounds = array<i64: 1>, scalar_prefetch = 0 : i64, scratch_operands = 0 : i64, tpu.core_type = #tpu.core_type<tc>, window_params = [{transform_indices = @transform_0, window_bounds = array<i64: 16, 32>}, {transform_indices = @transform_1, window_bounds = array<i64: 16, 32>}, {pipeline_mode = #tpu.pipeline_mode<synchronous>, transform_indices = @transform_2, window_bounds = array<i64: 1, 32>}, {pipeline_mode = #tpu.pipeline_mode<synchronous>, transform_indices = @transform_3, window_bounds = array<i64: 1, 32>}, {pipeline_mode = #tpu.pipeline_mode<synchronous>, transform_indices = @transform_4, window_bounds = array<i64: 1, 32>}, {pipeline_mode = #tpu.pipeline_mode<synchronous>, transform_indices = @transform_5, window_bounds = array<i64: 1, 32>}, {transform_indices = @transform_6, window_bounds = array<i64: 16, 32>}, {transform_indices = @transform_7, window_bounds = array<i64: 16, 32>}]} {
    %c0 = arith.constant 0 : index
    %c0_0 = arith.constant 0 : index
    %0 = vector.load %arg1[%c0, %c0_0] : memref<16x32xf32, #tpu.memory_space<vmem>>, vector<16x32xf32>
    %c0_1 = arith.constant 0 : index
    %c0_2 = arith.constant 0 : index
    %1 = vector.load %arg2[%c0_1, %c0_2] : memref<16x32xf32, #tpu.memory_space<vmem>>, vector<16x32xf32>
    %cst = arith.constant dense<0.000000e+00> : vector<16xf32>
    %2 = vector.multi_reduction <add>, %0, %cst [1] : vector<16x32xf32> to vector<16xf32>
    %3 = vector.shape_cast %2 : vector<16xf32> to vector<16x1xf32>
    %cst_3 = arith.constant 3.200000e+01 : f32
    %4 = vector.broadcast %cst_3 : f32 to vector<16x1xf32>
    %5 = arith.divf %3, %4 : vector<16x1xf32>
    %6 = vector.broadcast %5 : vector<16x1xf32> to vector<16x32xf32>
    %7 = arith.subf %0, %6 : vector<16x32xf32>
    %8 = arith.mulf %7, %7 : vector<16x32xf32>
    %cst_4 = arith.constant dense<0.000000e+00> : vector<16xf32>
    %9 = vector.multi_reduction <add>, %8, %cst_4 [1] : vector<16x32xf32> to vector<16xf32>
    %10 = vector.shape_cast %9 : vector<16xf32> to vector<16x1xf32>
    %cst_5 = arith.constant 0.0322580636 : f32
    %11 = vector.broadcast %cst_5 : f32 to vector<16x1xf32>
    %12 = arith.mulf %10, %11 : vector<16x1xf32>
    %cst_6 = arith.constant 9.99999971E-10 : f32
    %13 = vector.broadcast %cst_6 : f32 to vector<16x1xf32>
    %14 = arith.addf %12, %13 : vector<16x1xf32>
    %15 = math.rsqrt %14 : vector<16x1xf32>
    %16 = arith.mulf %15, %15 : vector<16x1xf32>
    %c0_7 = arith.constant 0 : index
    %c0_8 = arith.constant 0 : index
    %17 = vector.load %arg3[%c0_7, %c0_8] : memref<1x32xf32, #tpu.memory_space<vmem>>, vector<1x32xf32>
    %c0_9 = arith.constant 0 : index
    %c0_10 = arith.constant 0 : index
    %18 = vector.load %arg4[%c0_9, %c0_10] : memref<1x32xf32, #tpu.memory_space<vmem>>, vector<1x32xf32>
    %c0_11 = arith.constant 0 : index
    %c0_12 = arith.constant 0 : index
    %19 = vector.load %arg5[%c0_11, %c0_12] : memref<1x32xf32, #tpu.memory_space<vmem>>, vector<1x32xf32>
    %c0_13 = arith.constant 0 : index
    %c0_14 = arith.constant 0 : index
    %20 = vector.load %arg6[%c0_13, %c0_14] : memref<1x32xf32, #tpu.memory_space<vmem>>, vector<1x32xf32>
    %21 = vector.broadcast %15 : vector<16x1xf32> to vector<16x32xf32>
    %22 = arith.mulf %7, %21 : vector<16x32xf32>
    %23 = vector.broadcast %17 : vector<1x32xf32> to vector<16x32xf32>
    %24 = arith.mulf %22, %23 : vector<16x32xf32>
    %25 = vector.broadcast %18 : vector<1x32xf32> to vector<16x32xf32>
    %26 = arith.addf %24, %25 : vector<16x32xf32>
    %c0_15 = arith.constant 0 : index
    %c0_16 = arith.constant 0 : index
    %27 = vector.load %arg7[%c0_15, %c0_16] : memref<16x32xf32, #tpu.memory_space<vmem>>, vector<16x32xf32>
    tpu.vector_store %arg7[%c0_15, %c0_16], %26 {strides = array<i32>} : memref<16x32xf32, #tpu.memory_space<vmem>>, vector<16x32xf32>,
    %28 = vector.broadcast %16 : vector<16x1xf32> to vector<16x32xf32>
    %29 = arith.mulf %1, %28 : vector<16x32xf32>
    %30 = vector.broadcast %19 : vector<1x32xf32> to vector<16x32xf32>
    %31 = arith.mulf %29, %30 : vector<16x32xf32>
    %32 = vector.broadcast %20 : vector<1x32xf32> to vector<16x32xf32>
    %33 = arith.addf %31, %32 : vector<16x32xf32>
    %c0_17 = arith.constant 0 : index
    %c0_18 = arith.constant 0 : index
    %34 = vector.load %arg8[%c0_17, %c0_18] : memref<16x32xf32, #tpu.memory_space<vmem>>, vector<16x32xf32>
    tpu.vector_store %arg8[%c0_17, %c0_18], %33 {strides = array<i32>} : memref<16x32xf32, #tpu.memory_space<vmem>>, vector<16x32xf32>,
    return
  }
  func.func @transform_0(%arg0: i32) -> (i32, i32) {
    %c0_i32 = arith.constant 0 : i32
    %c0_i32_0 = arith.constant 0 : i32
    return %arg0, %c0_i32 : i32, i32
  }
  func.func @transform_1(%arg0: i32) -> (i32, i32) {
    %c0_i32 = arith.constant 0 : i32
    %c0_i32_0 = arith.constant 0 : i32
    return %arg0, %c0_i32 : i32, i32
  }
  func.func @transform_2(%arg0: i32) -> (i32, i32) {
    %c0_i32 = arith.constant 0 : i32
    %c0_i32_0 = arith.constant 0 : i32
    %c0_i32_1 = arith.constant 0 : i32
    return %c0_i32, %c0_i32_0 : i32, i32
  }
  func.func @transform_3(%arg0: i32) -> (i32, i32) {
    %c0_i32 = arith.constant 0 : i32
    %c0_i32_0 = arith.constant 0 : i32
    %c0_i32_1 = arith.constant 0 : i32
    return %c0_i32, %c0_i32_0 : i32, i32
  }
  func.func @transform_4(%arg0: i32) -> (i32, i32) {
    %c0_i32 = arith.constant 0 : i32
    %c0_i32_0 = arith.constant 0 : i32
    %c0_i32_1 = arith.constant 0 : i32
    return %c0_i32, %c0_i32_0 : i32, i32
  }
  func.func @transform_5(%arg0: i32) -> (i32, i32) {
    %c0_i32 = arith.constant 0 : i32
    %c0_i32_0 = arith.constant 0 : i32
    %c0_i32_1 = arith.constant 0 : i32
    return %c0_i32, %c0_i32_0 : i32, i32
  }
  func.func @transform_6(%arg0: i32) -> (i32, i32) {
    %c0_i32 = arith.constant 0 : i32
    %c0_i32_0 = arith.constant 0 : i32
    return %arg0, %c0_i32 : i32, i32
  }
  func.func @transform_7(%arg0: i32) -> (i32, i32) {
    %c0_i32 = arith.constant 0 : i32
    %c0_i32_0 = arith.constant 0 : i32
    return %arg0, %c0_i32 : i32, i32
  }
}

</mosaic_0001>

<llo_original>
// kernel: tpu_custom_call.1
$region0: #{tpu_custom_call.1}
  #allocation0 [shape = 'u32[]', space=smem, size = 0x4, offset = 0x4, fixed_abs, tag = 'smem constant byte address 0x4 - core index']
  #allocation1 [shape = 'u32[144,128]{1,0:T(1,128)}', space=vmem, size = 0x12000, scoped, tag = 'internal scratch']
  %s0 = inlined_call_operand.hbm [shape: f32[16,32], index: 0, kind: input, shape index: {}]
  %s1 = inlined_call_operand.hbm [shape: f32[16,32], index: 1, kind: input, shape index: {}]
  %s2 = inlined_call_operand.vmem [shape: f32[1,32], index: 2, kind: input, shape index: {}]
  %s3 = inlined_call_operand.vmem [shape: f32[1,32], index: 3, kind: input, shape index: {}]
  %s4 = inlined_call_operand.vmem [shape: f32[1,32], index: 4, kind: input, shape index: {}]
  %s5 = inlined_call_operand.vmem [shape: f32[1,32], index: 5, kind: input, shape index: {}]
  %s6 = inlined_call_operand.hbm [shape: f32[16,32], index: 6, kind: output, shape index: {0}]
  %s7 = inlined_call_operand.hbm [shape: f32[16,32], index: 7, kind: output, shape index: {1}]
  %8 = xla_tuple %s6, %s7
  %s9 = sld [smem:[#allocation0]]
  $region50: #{tpu_custom_call.1} parent=0
    _
  %s11 = ssub.s32 1, %s9
  %s12 = scalar_select 0, %s11, %s9
  $region1: #{tpu_custom_call.1} parent=0
    #allocation2 [shape = 'u8[8192]{0}', space=vmem, size = 0x2000, scoped, tag = 'input window, operand 0, single buffered']
    #allocation3 [shape = 's32[1]{0}', space=sflag, size = 0x4, scoped, tag = 'scoped memory for tpu_custom_call.1']
    #allocation4 [shape = 's32[1]{0}', space=sflag, size = 0x4, scoped, tag = 'scoped memory for tpu_custom_call.1']
    #allocation5 [shape = 'u8[8192]{0}', space=vmem, size = 0x2000, scoped, tag = 'input window, operand 1, single buffered']
    #allocation6 [shape = 's32[1]{0}', space=sflag, size = 0x4, scoped, tag = 'scoped memory for tpu_custom_call.1']
    #allocation7 [shape = 'u8[8192]{0}', space=vmem, size = 0x2000, scoped, tag = 'output window, operand 0, single buffered']
    #allocation8 [shape = 'u8[8192]{0}', space=vmem, size = 0x2000, scoped, tag = 'output window, operand 1, single buffered']
    #allocation9 [shape = 's32[1]{0}', space=sflag, size = 0x4, scoped, tag = 'scoped memory for tpu_custom_call.1']
    %13 = vsyncpa [#allocation3], 0
    %14 = vsyncpa [#allocation6], 0
    %15 = vsyncpa [#allocation4], 0
    %16 = vsyncpa [#allocation9], 0
    // Predicated region
    $region2: #{tpu_custom_call.1} parent=1 // pred_check
      _
    $region3: #{tpu_custom_call.1} parent=1 // pred_check_branch
      %18 = sbr.rel (0) target = $region5
    $region4: #{tpu_custom_call.1} parent=1 // pred_region
      %s20 = ssub.s32 256, 256
      %21 = vsyncadd [#allocation3], %s20
      %s22 = sshll.u32 [#allocation2], 4
      %s23 = int_to_ptr.vmem [resolvable:$true] %s22
      %28 = dma.hbm_to_vmem [thread:$0]  %s0, 256, %s23, [#allocation3], 128, 128, 8
    $region5: #{tpu_custom_call.1} parent=1 // pred_fallthru
      _
    // Predicated region
    $region6: #{tpu_custom_call.1} parent=1 // pred_check
      _
    $region7: #{tpu_custom_call.1} parent=1 // pred_check_branch
      %30 = sbr.rel (0) target = $region9
    $region8: #{tpu_custom_call.1} parent=1 // pred_region
      %s32 = ssub.s32 256, 256
      %33 = vsyncadd [#allocation6], %s32
      %s34 = sshll.u32 [#allocation5], 4
      %s35 = int_to_ptr.vmem [resolvable:$true] %s34
      %40 = dma.hbm_to_vmem [thread:$0]  %s1, 256, %s35, [#allocation6], 128, 128, 8
    $region9: #{tpu_custom_call.1} parent=1 // pred_fallthru
      _
    // Predicated region
    $region10: #{tpu_custom_call.1} parent=1 // pred_check
      _
    $region11: #{tpu_custom_call.1} parent=1 // pred_check_branch
      %42 = sbr.rel (0) target = $region13
    $region12: #{tpu_custom_call.1} parent=1 // pred_region
      _
    $region13: #{tpu_custom_call.1} parent=1 // pred_fallthru
      _
    // Predicated region
    $region14: #{tpu_custom_call.1} parent=1 // pred_check
      _
    $region15: #{tpu_custom_call.1} parent=1 // pred_check_branch
      %44 = sbr.rel (0) target = $region17
    $region16: #{tpu_custom_call.1} parent=1 // pred_region
      _
    $region17: #{tpu_custom_call.1} parent=1 // pred_fallthru
      _
    // Predicated region
    $region18: #{tpu_custom_call.1} parent=1 // pred_check
      _
    $region19: #{tpu_custom_call.1} parent=1 // pred_check_branch
      %46 = sbr.rel (0) target = $region21
    $region20: #{tpu_custom_call.1} parent=1 // pred_region
      _
    $region21: #{tpu_custom_call.1} parent=1 // pred_fallthru
      _
    // Predicated region
    $region22: #{tpu_custom_call.1} parent=1 // pred_check
      _
    $region23: #{tpu_custom_call.1} parent=1 // pred_check_branch
      %48 = sbr.rel (0) target = $region25
    $region24: #{tpu_custom_call.1} parent=1 // pred_region
      _
    $region25: #{tpu_custom_call.1} parent=1 // pred_fallthru
      _
    // Predicated region
    $region26: #{tpu_custom_call.1} parent=1 // pred_check
      _
    $region27: #{tpu_custom_call.1} parent=1 // pred_check_branch
      %50 = sbr.rel (0) target = $region29
    $region28: #{tpu_custom_call.1} parent=1 // pred_region
      %51 = dma.done [#allocation3], 256
    $region29: #{tpu_custom_call.1} parent=1 // pred_fallthru
      _
    // Predicated region
    $region30: #{tpu_custom_call.1} parent=1 // pred_check
      _
    $region31: #{tpu_custom_call.1} parent=1 // pred_check_branch
      %53 = sbr.rel (0) target = $region33
    $region32: #{tpu_custom_call.1} parent=1 // pred_region
      %54 = dma.done [#allocation6], 256
    $region33: #{tpu_custom_call.1} parent=1 // pred_fallthru
      _
    %v55 = vld [vmem:[#allocation2] sm:$0xff]
    %v56 = vld [vmem:[#allocation2 + $0x8] sm:$0xff]
    %v57 = vld [vmem:[#allocation5] sm:$0xff]
    %v58 = vld [vmem:[#allocation5 + $0x8] sm:$0xff]
    %vm59 = vcmask 261120
    %v60 = vsel %vm59, %v55, 0.0
    %61 = vadd.xlane.f32.xlu0 %v60
    %v62 = vpop.xlane.xlu0 %61
    %v63 = vsel %vm59, %v56, 0.0
    %64 = vadd.xlane.f32.xlu0 %v63
    %v65 = vpop.xlane.xlu0 %64
    %v66 = vrcp.pop 32.0
    %v67 = vmul.f32 %v62, %v66
    %v68 = vmul.f32 %v65, %v66
    %v69 = vsub.f32 %v55, %v67
    %v70 = vsub.f32 %v56, %v68
    %v71 = vmul.f32 %v69, %v69
    %v72 = vmul.f32 %v70, %v70
    %v73 = vsel %vm59, %v71, 0.0
    %74 = vadd.xlane.f32.xlu0 %v73
    %v75 = vpop.xlane.xlu0 %74
    %v76 = vsel %vm59, %v72, 0.0
    %77 = vadd.xlane.f32.xlu0 %v76
    %v78 = vpop.xlane.xlu0 %77
    %v79 = vmul.f32 %v75, 0.032258064
    %v80 = vmul.f32 %v78, 0.032258064
    %v81 = vadd.f32 %v79, 1e-09
    %v82 = vadd.f32 %v80, 1e-09
    %v83 = vrsqrt.pop %v81
    %v84 = vrsqrt.pop %v82
    %v85 = vmul.f32 %v83, %v83
    %v86 = vmul.f32 %v84, %v84
    %v87 = vld [vmem:[%s2] sm:$0x1]
    %v88 = vld [vmem:[%s3] sm:$0x1]
    %v89 = vld [vmem:[%s4] sm:$0x1]
    %v90 = vld [vmem:[%s5] sm:$0x1]
    %v91 = vmul.f32 %v69, %v83
    %v92 = vmul.f32 %v70, %v84
    %v94 = vlaneseq
    %v95 = vshrl.u32 %v94, 7
    %v96 = vsub.s32 0, %v95
    %v97 = vrot.slane %v87, %v96
    %v99 = vmul.f32 %v91, %v97
    %v100 = vmul.f32 %v92, %v97
    %v102 = vlaneseq
    %v103 = vshrl.u32 %v102, 7
    %v104 = vsub.s32 0, %v103
    %v105 = vrot.slane %v88, %v104
    %v107 = vadd.f32 %v99, %v105
    %v108 = vadd.f32 %v100, %v105
    %109 = vst.msk [vmem:[#allocation7] sm:$0xff] %vm59, %v107
    %110 = vst.msk [vmem:[#allocation7 + $0x8] sm:$0xff] %vm59, %v108
    %v111 = vmul.f32 %v57, %v85
    %v112 = vmul.f32 %v58, %v86
    %v114 = vlaneseq
    %v115 = vshrl.u32 %v114, 7
    %v116 = vsub.s32 0, %v115
    %v117 = vrot.slane %v89, %v116
    %v119 = vmul.f32 %v111, %v117
    %v120 = vmul.f32 %v112, %v117
    %v122 = vlaneseq
    %v123 = vshrl.u32 %v122, 7
    %v124 = vsub.s32 0, %v123
    %v125 = vrot.slane %v90, %v124
    %v127 = vadd.f32 %v119, %v125
    %v128 = vadd.f32 %v120, %v125
    %129 = vst.msk [vmem:[#allocation8] sm:$0xff] %vm59, %v127
    %130 = vst.msk [vmem:[#allocation8 + $0x8] sm:$0xff] %vm59, %v128
    // Predicated region
    $region34: #{tpu_custom_call.1} parent=1 // pred_check
      _
    $region35: #{tpu_custom_call.1} parent=1 // pred_check_branch
      %132 = sbr.rel (0) target = $region37
    $region36: #{tpu_custom_call.1} parent=1 // pred_region
      %s134 = ssub.s32 256, 256
      %135 = vsyncadd [#allocation4], %s134
      %s136 = sshll.u32 [#allocation7], 4
      %s137 = int_to_ptr.vmem [resolvable:$true] %s136
      %142 = dma.vmem_to_hbm [thread:$0]  %s137, 256, %s6, [#allocation4], 128, 128, 8
    $region37: #{tpu_custom_call.1} parent=1 // pred_fallthru
      _
    // Predicated region
    $region38: #{tpu_custom_call.1} parent=1 // pred_check
      _
    $region39: #{tpu_custom_call.1} parent=1 // pred_check_branch
      %144 = sbr.rel (0) target = $region41
    $region40: #{tpu_custom_call.1} parent=1 // pred_region
      %s146 = ssub.s32 256, 256
      %147 = vsyncadd [#allocation9], %s146
      %s148 = sshll.u32 [#allocation8], 4
      %s149 = int_to_ptr.vmem [resolvable:$true] %s148
      %154 = dma.vmem_to_hbm [thread:$0]  %s149, 256, %s7, [#allocation9], 128, 128, 8
    $region41: #{tpu_custom_call.1} parent=1 // pred_fallthru
      _
    // Predicated region
    $region42: #{tpu_custom_call.1} parent=1 // pred_check
      _
    $region43: #{tpu_custom_call.1} parent=1 // pred_check_branch
      %156 = sbr.rel (0) target = $region45
    $region44: #{tpu_custom_call.1} parent=1 // pred_region
      %157 = dma.done [#allocation4], 256
    $region45: #{tpu_custom_call.1} parent=1 // pred_fallthru
      _
    // Predicated region
    $region46: #{tpu_custom_call.1} parent=1 // pred_check
      _
    $region47: #{tpu_custom_call.1} parent=1 // pred_check_branch
      %159 = sbr.rel (0) target = $region49
    $region48: #{tpu_custom_call.1} parent=1 // pred_region
      %160 = dma.done [#allocation9], 256
    $region49: #{tpu_custom_call.1} parent=1 // pred_fallthru
      _
    %161 = vsyncpa [#allocation3], 1
    %162 = vsyncpa [#allocation6], 1
    %163 = vsyncpa [#allocation4], 1
    %164 = vsyncpa [#allocation9], 1

</llo_original>
